<compile_context>
chip_gen: v6e
topology: v6e:2x2x1
jax: 0.10.0
libtpu: 0.0.40
codegen_flags: <defaults>
</compile_context>

<pallas_src>
import functools

import jax
import jax.numpy as jnp
from jax.experimental import pallas as pl
from jax.experimental.pallas import tpu as pltpu


def _round_up(x: int, m: int) -> int:
    return ((x + m - 1) // m) * m


def _pick_col_block(h_pad: int, max_cols: int) -> int:
    """Largest multiple of 128 that divides h_pad and is <= max_cols (>=128)."""
    n_lanes = h_pad // 128
    best = 1
    for d in range(1, n_lanes + 1):
        if n_lanes % d == 0 and d * 128 <= max_cols:
            best = d
    return best * 128


def label_embedder_kernel(labels_ref, table_ref, o_ref, acc_ref, *, c_chunk):
    # labels_ref: (TM, 1)   int32  — this step's block of class labels
    # table_ref:  (C_pad, TH) f    — resident column slab of the embedding table
    # o_ref:      (TM, TH)  f      — gathered embeddings (column slab)
    # acc_ref:    (TM, TH)  f32    — accumulator scratch
    tm = labels_ref.shape[0]
    c_pad = table_ref.shape[0]
    n_chunks = c_pad // c_chunk

    labels = labels_ref[...]                      # (TM, 1) int32
    acc_ref[...] = jnp.zeros_like(acc_ref)

    def body(k, carry):
        base = pl.multiple_of(k * c_chunk, c_chunk)
        # one_hot[r, t] = 1.0 iff labels[r] == base + t     -> (TM, TC)
        class_ids = base + jax.lax.broadcasted_iota(
            jnp.int32, (tm, c_chunk), dimension=1)
        one_hot = (labels == class_ids).astype(table_ref.dtype)
        # Gather this C-chunk via MXU: (TM, TC) @ (TC, TH) -> (TM, TH), exact.
        acc_ref[...] += jnp.dot(
            one_hot,
            table_ref[pl.ds(base, c_chunk), :],
            preferred_element_type=jnp.float32,
        )
        return carry

    jax.lax.fori_loop(0, n_chunks, body, 0, unroll=(n_chunks <= 8))

    acc = acc_ref[...]
    # Skip the convert pass when the output dtype is already float32.
    o_ref[...] = acc if acc.dtype == o_ref.dtype else acc.astype(o_ref.dtype)


def label_embedder(labels, embedding_table, *, block_rows: int = 512,
                   class_chunk: int = 256, max_col_block: int = 512):
    """labels: (N,) int class ids. embedding_table: (C, H). Returns (N, H)."""
    n = labels.shape[0]
    c, h = embedding_table.shape
    out_dtype = embedding_table.dtype

    # --- tiling choices -----------------------------------------------------
    # Row block: multiple of 8 (sublane), capped at block_rows.
    tm = min(block_rows, _round_up(n, 8))
    n_pad = _round_up(n, tm)

    # Column block: pad H to a lane-dense multiple of 128 and split into slabs.
    h_pad = _round_up(h, 128)
    th = _pick_col_block(h_pad, max_col_block)

    # Class chunk for the in-kernel contraction loop (multiple of 8).
    tc = min(class_chunk, _round_up(c, 8))
    c_pad = _round_up(c, tc)

    # --- pad inputs (padded label rows gather row 0; sliced off afterwards) --
    labels_2d = jnp.pad(labels.astype(jnp.int32), (0, n_pad - n)).reshape(n_pad, 1)
    table = jnp.pad(embedding_table, ((0, c_pad - c), (0, h_pad - h)))

    # --- explicit VMEM budget -------------------------------------------------
    itemsize = jnp.dtype(out_dtype).itemsize
    est = (2 * (c_pad * th * itemsize)       # table column slab (double-buffered)
           + 2 * (tm * th * itemsize)        # output block (double-buffered)
           + 2 * (tm * 4)                    # labels block
           + tm * th * 4                     # f32 accumulator scratch
           + 2 * (tm * tc * 4))              # one-hot chunk intermediates
    vmem_limit = int(min(max(est + 16 * 1024 * 1024, 32 * 1024 * 1024),
                         64 * 1024 * 1024))

    # Column axis OUTER, row axis INNER: the table column slab index is constant
    # across all inner row steps, so it is DMA'd once per slab and stays resident.
    grid = (h_pad // th, n_pad // tm)

    kernel = functools.partial(label_embedder_kernel, c_chunk=tc)

    out = pl.pallas_call(
        kernel,
        out_shape=jax.ShapeDtypeStruct((n_pad, h_pad), out_dtype),
        grid_spec=pltpu.PrefetchScalarGridSpec(
            num_scalar_prefetch=0,
            grid=grid,
            in_specs=[
                # per-row-step block of labels
                pl.BlockSpec((tm, 1), lambda j, i: (i, 0)),
                # resident table column slab (constant across inner row axis)
                pl.BlockSpec((c_pad, th), lambda j, i: (0, j)),
            ],
            out_specs=pl.BlockSpec((tm, th), lambda j, i: (i, j)),
            scratch_shapes=[pltpu.VMEM((tm, th), jnp.float32)],
        ),
        compiler_params=pltpu.CompilerParams(
            dimension_semantics=("parallel", "parallel"),
            vmem_limit_bytes=vmem_limit,
        ),
    )(labels_2d, table)

    return out[:n, :h]


def reference(labels, embedding_table):
    """Pure-JAX reference matching PyTorch LabelEmbedder.forward."""
    return embedding_table[labels]


if __name__ == "__main__":
    key = jax.random.PRNGKey(0)
    k_lab, k_tab = jax.random.split(key)

    # Small shapes consistent with the module.
    num_classes = 16
    dropout_prob = 0.1          # > 0 -> table has one extra CFG row
    hidden_size = 32
    n = 8                       # batch of labels

    use_cfg_embedding = 1 if dropout_prob > 0 else 0
    rows = num_classes + use_cfg_embedding

    embedding_table = (
        jax.random.normal(k_tab, (rows, hidden_size), dtype=jnp.float32) * 0.02
    )
    labels = jax.random.randint(k_lab, (n,), 0, rows, dtype=jnp.int32)

    out = label_embedder(labels, embedding_table)
    out = jax.block_until_ready(out)

    ref = reference(labels, embedding_table)
    assert out.shape == (n, hidden_size)
    assert jnp.allclose(out, ref, atol=1e-6, rtol=0.0), (
        f"max abs err = {jnp.max(jnp.abs(out - ref))}"
    )

    print("KERNEL_OK")
</pallas_src>

<mosaic_0001>
module attributes {stable_mosaic.version = 11 : i64} {
  func.func @label_embedder_kernel(%arg0: i32, %arg1: i32, %arg2: memref<8x1xi32, #tpu.memory_space<vmem>>, %arg3: memref<24x128xf32, #tpu.memory_space<vmem>>, %arg4: memref<8x128xf32, #tpu.memory_space<vmem>>, %arg5: memref<8x128xf32, #tpu.memory_space<vmem>>) attributes {dimension_semantics = [#tpu.dimension_semantics<parallel>, #tpu.dimension_semantics<parallel>], iteration_bounds = array<i64: 1, 1>, scalar_prefetch = 0 : i64, scratch_operands = 1 : i64, tpu.core_type = #tpu.core_type<tc>, window_params = [{transform_indices = @transform_0, window_bounds = array<i64: 8, 1>}, {transform_indices = @transform_1, window_bounds = array<i64: 24, 128>}, {transform_indices = @transform_2, window_bounds = array<i64: 8, 128>}]} {
    %c0 = arith.constant 0 : index
    %c0_0 = arith.constant 0 : index
    %0 = vector.load %arg2[%c0, %c0_0] : memref<8x1xi32, #tpu.memory_space<vmem>>, vector<8x1xi32>
    %cst = arith.constant 0.000000e+00 : f32
    %1 = vector.broadcast %cst : f32 to vector<8x128xf32>
    %c0_1 = arith.constant 0 : index
    %c0_2 = arith.constant 0 : index
    %2 = vector.load %arg5[%c0_1, %c0_2] : memref<8x128xf32, #tpu.memory_space<vmem>>, vector<8x128xf32>
    tpu.vector_store %arg5[%c0_1, %c0_2], %1 {strides = array<i32>} : memref<8x128xf32, #tpu.memory_space<vmem>>, vector<8x128xf32>,
    %c0_i32 = arith.constant 0 : i32
    %c24_i32 = arith.constant 24 : i32
    %3 = arith.muli %c0_i32, %c24_i32 : i32
    %4 = tpu.assume_multiple %3, 24 : i32
    %5 = tpu.iota {dimensions = array<i32: 1>} : vector<8x24xi32>
    %6 = vector.broadcast %4 : i32 to vector<8x24xi32>
    %7 = arith.addi %6, %5 : vector<8x24xi32>
    %8 = vector.broadcast %0 : vector<8x1xi32> to vector<8x24xi32>
    %9 = arith.cmpi eq, %8, %7 : vector<8x24xi32>
    %10 = arith.extui %9 : vector<8x24xi1> to vector<8x24xi32>
    %11 = arith.sitofp %10 : vector<8x24xi32> to vector<8x24xf32>
    %c0_3 = arith.constant 0 : index
    %c0_4 = arith.constant 0 : index
    %12 = vector.load %arg5[%c0_3, %c0_4] : memref<8x128xf32, #tpu.memory_space<vmem>>, vector<8x128xf32>
    %13 = arith.index_cast %4 : i32 to index
    %c0_5 = arith.constant 0 : index
    %14 = vector.load %arg3[%13, %c0_5] : memref<24x128xf32, #tpu.memory_space<vmem>>, vector<24x128xf32>
    %cst_6 = arith.constant dense<0.000000e+00> : vector<8x128xf32>
    %15 = tpu.matmul %11, %14, %cst_6 {dimension_numbers = #tpu.dot_dimension_numbers<[1], [0], [0], [1], [0, 0, 1, 1], [], []>} : vector<8x24xf32>, vector<24x128xf32>, vector<8x128xf32> -> vector<8x128xf32>
    %16 = arith.addf %12, %15 : vector<8x128xf32>
    %c0_7 = arith.constant 0 : index
    %c0_8 = arith.constant 0 : index
    %17 = vector.load %arg5[%c0_7, %c0_8] : memref<8x128xf32, #tpu.memory_space<vmem>>, vector<8x128xf32>
    tpu.vector_store %arg5[%c0_7, %c0_8], %16 {strides = array<i32>} : memref<8x128xf32, #tpu.memory_space<vmem>>, vector<8x128xf32>,
    %c1_i32 = arith.constant 1 : i32
    %c0_9 = arith.constant 0 : index
    %c0_10 = arith.constant 0 : index
    %18 = vector.load %arg5[%c0_9, %c0_10] : memref<8x128xf32, #tpu.memory_space<vmem>>, vector<8x128xf32>
    %c0_11 = arith.constant 0 : index
    %c0_12 = arith.constant 0 : index
    %19 = vector.load %arg4[%c0_11, %c0_12] : memref<8x128xf32, #tpu.memory_space<vmem>>, vector<8x128xf32>
    tpu.vector_store %arg4[%c0_11, %c0_12], %18 {strides = array<i32>} : memref<8x128xf32, #tpu.memory_space<vmem>>, vector<8x128xf32>,
    return
  }
  func.func @transform_0(%arg0: i32, %arg1: i32) -> (i32, i32) {
    %c0_i32 = arith.constant 0 : i32
    %c0_i32_0 = arith.constant 0 : i32
    return %arg1, %c0_i32 : i32, i32
  }
  func.func @transform_1(%arg0: i32, %arg1: i32) -> (i32, i32) {
    %c0_i32 = arith.constant 0 : i32
    %c0_i32_0 = arith.constant 0 : i32
    return %c0_i32, %arg0 : i32, i32
  }
  func.func @transform_2(%arg0: i32, %arg1: i32) -> (i32, i32) {
    %c0_i32 = arith.constant 0 : i32
    return %arg1, %arg0 : i32, i32
  }
}

</mosaic_0001>

<llo_original>
// kernel: tpu_custom_call.1
$region0: #{tpu_custom_call.1}
  #allocation0 [shape = 'u32[]', space=smem, size = 0x4, offset = 0x4, fixed_abs, tag = 'smem constant byte address 0x4 - core index']
  #allocation1 [shape = 'u32[144,128]{1,0:T(1,128)}', space=vmem, size = 0x12000, scoped, tag = 'internal scratch']
  #allocation2 [shape = 'f32[8,128]{1,0:T(8,128)}', space=vmem, size = 0x1000, scoped, tag = 'scratch operand']
  %s0 = inlined_call_operand.vmem [shape: s32[8,1], index: 0, kind: input, shape index: {}]
  %s1 = inlined_call_operand.hbm [shape: f32[24,128], index: 1, kind: input, shape index: {}]
  %s2 = inlined_call_operand.hbm [shape: f32[8,128], index: 2, kind: output, shape index: {}]
  %s3 = sld [smem:[#allocation0]]
  $region22: #{tpu_custom_call.1} parent=0
    _
  %s5 = ssub.s32 1, %s3
  %s6 = scalar_select 0, %s5, %s3
  $region1: #{tpu_custom_call.1} parent=0
    #allocation3 [shape = 'u8[12288]{0}', space=vmem, size = 0x3000, scoped, tag = 'input window, operand 1, single buffered']
    #allocation4 [shape = 's32[1]{0}', space=sflag, size = 0x4, scoped, tag = 'scoped memory for tpu_custom_call.1']
    #allocation5 [shape = 's32[1]{0}', space=sflag, size = 0x4, scoped, tag = 'scoped memory for tpu_custom_call.1']
    #allocation6 [shape = 'u8[4096]{0}', space=vmem, size = 0x1000, scoped, tag = 'output window, operand 0, single buffered']
    %7 = vsyncpa [#allocation4], 0
    %8 = vsyncpa [#allocation5], 0
    // Predicated region
    $region2: #{tpu_custom_call.1} parent=1 // pred_check
      _
    $region3: #{tpu_custom_call.1} parent=1 // pred_check_branch
      %10 = sbr.rel (0) target = $region5
    $region4: #{tpu_custom_call.1} parent=1 // pred_region
      _
    $region5: #{tpu_custom_call.1} parent=1 // pred_fallthru
      _
    // Predicated region
    $region6: #{tpu_custom_call.1} parent=1 // pred_check
      _
    $region7: #{tpu_custom_call.1} parent=1 // pred_check_branch
      %12 = sbr.rel (0) target = $region9
    $region8: #{tpu_custom_call.1} parent=1 // pred_region
      %s14 = ssub.s32 384, 384
      %15 = vsyncadd [#allocation4], %s14
      %s16 = sshll.u32 [#allocation3], 4
      %s17 = int_to_ptr.vmem [resolvable:$true] %s16
      %22 = dma.hbm_to_vmem [thread:$0]  %s1, 384, %s17, [#allocation4], 128, 128, 8
    $region9: #{tpu_custom_call.1} parent=1 // pred_fallthru
      _
    // Predicated region
    $region10: #{tpu_custom_call.1} parent=1 // pred_check
      _
    $region11: #{tpu_custom_call.1} parent=1 // pred_check_branch
      %24 = sbr.rel (0) target = $region13
    $region12: #{tpu_custom_call.1} parent=1 // pred_region
      %25 = dma.done [#allocation4], 384
    $region13: #{tpu_custom_call.1} parent=1 // pred_fallthru
      _
    %v26 = vld [vmem:[%s0] sm:$0xff]
    %27 = vst [vmem:[#allocation2] sm:$0xff] 0.0
    %v28 = vlaneseq
    %v29 = vand.u32 %v28, 127
    %v30 = vstv 0
    %v31 = vadd.s32 %v30, %v29
    %32 = vset.pattern.permute.xlu0 0
    %33 = vperm.xlu0 %32, %v26
    %v34 = vpop.permute.xlu0 %33
    %vm35 = vcmp.eq.s32.totalorder %v34, %v31
    %v36 = vsel %vm35, 1, 0
    %v37 = vcvt.s32.f32 %v36
    %v38 = vld [vmem:[#allocation2] sm:$0xff]
    %v39 = vld [vmem:[#allocation3] sm:$0xff]
    %v40 = vld [vmem:[#allocation3 + $0x8] sm:$0xff]
    %v41 = vld [vmem:[#allocation3 + $0x10] sm:$0xff]
    %vm42 = vcmask 195584
    %v44 = vsel %vm42, %v37, 0
    %46 = vmatprep.subr.mxu0 0.0
    %47 = vmatpush1.msra.mxu0 0.0
    %48 = vmatprep.subr.mxu0 0.0
    %49 = vmatpush1.msra.mxu0 0.0
    %50 = vmatprep.subr.mxu0 0.0
    %51 = vmatpush1.msra.mxu0 0.0
    %52 = vmatprep.subr.mxu0 0.0
    %53 = vmatpush1.msra.mxu0 0.0
    %54 = vmatprep.subr.mxu0 0.0
    %55 = vmatpush1.msra.mxu0 0.0
    %56 = vmatprep.subr.mxu0 0.0
    %57 = vmatpush1.msra.mxu0 0.0
    %58 = vmatprep.subr.mxu0 0.0
    %59 = vmatpush1.msra.mxu0 0.0
    %60 = vmatprep.subr.mxu0 0.0
    %61 = vmatpush1.msra.mxu0 0.0
    %62 = vmatprep.subr.mxu0 0.0
    %63 = vmatpush1.msra.mxu0 0.0
    %64 = vmatprep.subr.mxu0 0.0
    %65 = vmatpush1.msra.mxu0 0.0
    %66 = vmatprep.subr.mxu0 0.0
    %67 = vmatpush1.msra.mxu0 0.0
    %68 = vmatprep.subr.mxu0 0.0
    %69 = vmatpush1.msra.mxu0 0.0
    %70 = vmatprep.subr.mxu0 0.0
    %71 = vmatpush1.msra.mxu0 0.0
    %72 = vmatprep.subr.mxu0 0.0
    %73 = vmatpush1.msra.mxu0 %v41
    %74 = vmatprep.subr.mxu0 0.0
    %75 = vmatpush1.msra.mxu0 %v40
    %76 = vmatprep.subr.mxu0 0.0
    %77 = vmatpush1.msra.mxu0 %v39
    %78 = vmatprep.subr.mxu0 0.0
    %79 = vmatpush2.msra.mxu0 0.0
    %80 = vmatprep.subr.mxu0 0.0
    %81 = vmatpush2.msra.mxu0 0.0
    %82 = vmatprep.subr.mxu0 0.0
    %83 = vmatpush2.msra.mxu0 0.0
    %84 = vmatprep.subr.mxu0 0.0
    %85 = vmatpush2.msra.mxu0 0.0
    %86 = vmatprep.subr.mxu0 0.0
    %87 = vmatpush2.msra.mxu0 0.0
    %88 = vmatprep.subr.mxu0 0.0
    %89 = vmatpush2.msra.mxu0 0.0
    %90 = vmatprep.subr.mxu0 0.0
    %91 = vmatpush2.msra.mxu0 0.0
    %92 = vmatprep.subr.mxu0 0.0
    %93 = vmatpush2.msra.mxu0 0.0
    %94 = vmatprep.subr.mxu0 0.0
    %95 = vmatpush2.msra.mxu0 0.0
    %96 = vmatprep.subr.mxu0 0.0
    %97 = vmatpush2.msra.mxu0 0.0
    %98 = vmatprep.subr.mxu0 0.0
    %99 = vmatpush2.msra.mxu0 0.0
    %100 = vmatprep.subr.mxu0 0.0
    %101 = vmatpush2.msra.mxu0 0.0
    %102 = vmatprep.subr.mxu0 0.0
    %103 = vmatpush2.msra.mxu0 0.0
    %104 = vmatprep.subr.mxu0 0.0
    %105 = vmatpush2.msra.mxu0 0.0
    %106 = vmatprep.subr.mxu0 0.0
    %107 = vmatpush2.msra.mxu0 0.0
    %108 = vmatprep.subr.mxu0 0.0
    %109 = vmatpush2.msra.mxu0 0.0
    %110 = vmatprep.mubr.f32.mxu0 0.0
    %111 = vmatmul.mubr.f32.gmra.mxu0 %v44
    %v112 = vpop.f32.mrf.mxu0
    %v113 = vadd.f32 0.0, %v112
    %v114 = vpop.f32.mrf.mxu0
    %115 = vdwg.mxu0
    %v116 = vadd.f32 %v38, %v113
    %117 = vst [vmem:[#allocation2] sm:$0xff] %v116
    %v118 = vld [vmem:[#allocation2] sm:$0xff]
    %119 = vst [vmem:[#allocation6] sm:$0xff] %v118
    // Predicated region
    $region14: #{tpu_custom_call.1} parent=1 // pred_check
      _
    $region15: #{tpu_custom_call.1} parent=1 // pred_check_branch
      %121 = sbr.rel (0) target = $region17
    $region16: #{tpu_custom_call.1} parent=1 // pred_region
      %s123 = ssub.s32 128, 128
      %124 = vsyncadd [#allocation5], %s123
      %s126 = sshll.u32 [#allocation6], 4
      %s127 = int_to_ptr.vmem [resolvable:$true] %s126
      %129 = dma.vmem_to_hbm [thread:$0]  %s127, 128, %s2, [#allocation5]
    $region17: #{tpu_custom_call.1} parent=1 // pred_fallthru
      _
    // Predicated region
    $region18: #{tpu_custom_call.1} parent=1 // pred_check
      _
    $region19: #{tpu_custom_call.1} parent=1 // pred_check_branch
      %131 = sbr.rel (0) target = $region21
    $region20: #{tpu_custom_call.1} parent=1 // pred_region
      %132 = dma.done [#allocation5], 128
    $region21: #{tpu_custom_call.1} parent=1 // pred_fallthru
      _
    %133 = vsyncpa [#allocation4], 1
    %134 = vsyncpa [#allocation5], 1

</llo_original>
